<compile_context>
chip_gen: v7x
topology: tpu7x:2x2x1
jax: 0.10.0
libtpu: 0.0.40
codegen_flags: <defaults>
</compile_context>

<pallas_src>
import math

import jax
import jax.numpy as jnp
from jax.experimental import pallas as pl
from jax.experimental.pallas import tpu as pltpu


def feature_activation_kernel(qw_ref, c_ref, w_ref, o_ref):
    """One (m-block, b) grid step.

    qw_ref : (1, 1, W)   query row b, pre-scaled by w and tiled R times
    c_ref  : (TMR, W)    R-grouped case rows for this m-block
    w_ref  : (1, W)      feature weights tiled R times
    o_ref  : (1, TMR, W) output slab for (b, m-block)
    """
    cw = c_ref[...] * w_ref[...]        # (TMR, W)  cases * w on the VPU
    d = qw_ref[0] - cw                  # (1, W) - (TMR, W) broadcast
    o_ref[0] = d * d                    # fused, lane-dense store


def feature_activation(query, cases, f1weight):
    """query: (B, N), cases: (M, N), f1weight: (N,) -> (B, M, N)."""
    B, N = query.shape
    M, _ = cases.shape
    dtype = query.dtype
    itemsize = jnp.dtype(dtype).itemsize

    # Group R consecutive case rows into one lane-dense row of width W = R*N
    # (multiple of 128). Pure reshape of the contiguous buffer. Fall back to
    # R = 1 (last dim = N, full-dim block -> still legal) if M % R != 0.
    R = 128 // math.gcd(N, 128)
    if M % R != 0:
        R = 1
    W = R * N
    MR = M // R

    cases_g = cases.reshape(MR, W)                                    # (MR, W)
    w_g = jnp.tile(f1weight.reshape(1, N), (1, R))                    # (1, W)
    qw_g = jnp.tile((query * f1weight).reshape(B, 1, N), (1, 1, R))   # (B, 1, W)

    # ~1 MiB output block (>= 512 grouped rows for real shapes), double
    # buffered this stays ~4 MiB of VMEM -> safe on v5e/v6e/v7x defaults.
    target_rows = max(1, (1 << 20) // (W * itemsize))
    if MR <= target_rows:
        tmr = MR
    else:
        tmr = max(8, (target_rows // 8) * 8)
    grid_m = pl.cdiv(MR, tmr)

    out_g = pl.pallas_call(
        feature_activation_kernel,
        out_shape=jax.ShapeDtypeStruct((B, MR, W), dtype),
        grid=(grid_m, B),
        in_specs=[
            pl.BlockSpec((1, 1, W), lambda m, b: (b, 0, 0)),   # qw_g (tiny)
            pl.BlockSpec((tmr, W), lambda m, b: (m, 0)),       # cases_g tile
            pl.BlockSpec((1, W), lambda m, b: (0, 0)),         # w_g (resident)
        ],
        out_specs=pl.BlockSpec((1, tmr, W), lambda m, b: (b, m, 0)),
        compiler_params=pltpu.CompilerParams(
            dimension_semantics=("parallel", "arbitrary")),
    )(qw_g, cases_g, w_g)

    # Free reshape back to the module's (B, M, N) row-major layout.
    return out_g.reshape(B, M, N)


if __name__ == "__main__":
    # Small shapes consistent with the module: B queries, M cases, N features.
    B, M, N = 2, 8, 32
    key = jax.random.PRNGKey(0)
    kq, kc = jax.random.split(key)
    query = jax.random.normal(kq, (B, N), dtype=jnp.float32)
    cases = jax.random.normal(kc, (M, N), dtype=jnp.float32)

    # Parameter init exactly as the module's __init__: torch.ones(num_features)
    f1weight = jnp.ones((N,), dtype=jnp.float32)

    out = feature_activation(query, cases, f1weight)
    out = jax.block_until_ready(out)

    # Pure-JAX reference check
    ref = (query[:, None, :] * f1weight - cases[None, :, :] * f1weight) ** 2
    assert out.shape == (B, M, N)
    assert jnp.allclose(out, ref, atol=1e-6, rtol=1e-6)

    print("KERNEL_OK")
</pallas_src>

<mosaic_0001>
module attributes {stable_mosaic.version = 11 : i64} {
  func.func @feature_activation_kernel(%arg0: i32, %arg1: i32, %arg2: memref<1x1x128xf32, #tpu.memory_space<vmem>>, %arg3: memref<2x128xf32, #tpu.memory_space<vmem>>, %arg4: memref<1x128xf32, #tpu.memory_space<vmem>>, %arg5: memref<1x2x128xf32, #tpu.memory_space<vmem>>) attributes {dimension_semantics = [#tpu.dimension_semantics<parallel>, #tpu.dimension_semantics<arbitrary>], iteration_bounds = array<i64: 1, 2>, scalar_prefetch = 0 : i64, scratch_operands = 0 : i64, tpu.core_type = #tpu.core_type<tc>, window_params = [{transform_indices = @transform_0, window_bounds = array<i64: 1, 1, 128>}, {transform_indices = @transform_1, window_bounds = array<i64: 2, 128>}, {pipeline_mode = #tpu.pipeline_mode<synchronous>, transform_indices = @transform_2, window_bounds = array<i64: 1, 128>}, {transform_indices = @transform_3, window_bounds = array<i64: 1, 2, 128>}]} {
    %c0 = arith.constant 0 : index
    %c0_0 = arith.constant 0 : index
    %0 = vector.load %arg3[%c0, %c0_0] : memref<2x128xf32, #tpu.memory_space<vmem>>, vector<2x128xf32>
    %c0_1 = arith.constant 0 : index
    %c0_2 = arith.constant 0 : index
    %1 = vector.load %arg4[%c0_1, %c0_2] : memref<1x128xf32, #tpu.memory_space<vmem>>, vector<1x128xf32>
    %2 = vector.broadcast %1 : vector<1x128xf32> to vector<2x128xf32>
    %3 = arith.mulf %0, %2 : vector<2x128xf32>
    %c0_3 = arith.constant 0 : index
    %c0_4 = arith.constant 0 : index
    %c0_5 = arith.constant 0 : index
    %4 = vector.load %arg2[%c0_3, %c0_4, %c0_5] : memref<1x1x128xf32, #tpu.memory_space<vmem>>, vector<1x1x128xf32>
    %5 = vector.shape_cast %4 : vector<1x1x128xf32> to vector<1x128xf32>
    %6 = vector.broadcast %5 : vector<1x128xf32> to vector<2x128xf32>
    %7 = arith.subf %6, %3 : vector<2x128xf32>
    %8 = arith.mulf %7, %7 : vector<2x128xf32>
    %c0_6 = arith.constant 0 : index
    %c0_7 = arith.constant 0 : index
    %c0_8 = arith.constant 0 : index
    %9 = vector.load %arg5[%c0_6, %c0_7, %c0_8] : memref<1x2x128xf32, #tpu.memory_space<vmem>>, vector<1x2x128xf32>
    %10 = vector.shape_cast %9 : vector<1x2x128xf32> to vector<2x128xf32>
    %11 = vector.shape_cast %8 : vector<2x128xf32> to vector<1x2x128xf32>
    tpu.vector_store %arg5[%c0_6, %c0_7, %c0_8], %11 {strides = array<i32>} : memref<1x2x128xf32, #tpu.memory_space<vmem>>, vector<1x2x128xf32>,
    return
  }
  func.func @transform_0(%arg0: i32, %arg1: i32) -> (i32, i32, i32) {
    %c0_i32 = arith.constant 0 : i32
    %c0_i32_0 = arith.constant 0 : i32
    %c0_i32_1 = arith.constant 0 : i32
    return %arg1, %c0_i32, %c0_i32_0 : i32, i32, i32
  }
  func.func @transform_1(%arg0: i32, %arg1: i32) -> (i32, i32) {
    %c0_i32 = arith.constant 0 : i32
    %c0_i32_0 = arith.constant 0 : i32
    return %arg0, %c0_i32 : i32, i32
  }
  func.func @transform_2(%arg0: i32, %arg1: i32) -> (i32, i32) {
    %c0_i32 = arith.constant 0 : i32
    %c0_i32_0 = arith.constant 0 : i32
    %c0_i32_1 = arith.constant 0 : i32
    return %c0_i32, %c0_i32_0 : i32, i32
  }
  func.func @transform_3(%arg0: i32, %arg1: i32) -> (i32, i32, i32) {
    %c0_i32 = arith.constant 0 : i32
    %c0_i32_0 = arith.constant 0 : i32
    return %arg1, %arg0, %c0_i32 : i32, i32, i32
  }
}

</mosaic_0001>

<llo_original>
// kernel: tpu_custom_call.1
$region0: #{tpu_custom_call.1}
  #allocation0 [shape = 'u32[]', space=smem, size = 0x4, offset = 0x4, fixed_abs, tag = 'smem constant byte address 0x4 - core index']
  #allocation1 [shape = 'u32[144,128]{1,0:T(1,128)}', space=vmem, size = 0x12000, scoped, tag = 'internal scratch']
  %s0 = inlined_call_operand.hbm [shape: f32[2,1,128], index: 0, kind: input, shape index: {}]
  %s1 = inlined_call_operand.vmem [shape: f32[2,128], index: 1, kind: input, shape index: {}]
  %s2 = inlined_call_operand.vmem [shape: f32[1,128], index: 2, kind: input, shape index: {}]
  %s3 = inlined_call_operand.hbm [shape: f32[2,2,128], index: 3, kind: output, shape index: {}]
  %s4 = sld [smem:[#allocation0]]
  $region49: #{tpu_custom_call.1} parent=0
    _
  %s6 = ssub.s32 1, %s4
  %s7 = scalar_select 0, %s6, %s4
  $region1: #{tpu_custom_call.1} parent=0
    #allocation2 [shape = 'u8[1024]{0}', space=vmem, size = 0x400, scoped, tag = 'input window, operand 0']
    #allocation3 [shape = 's32[2]{0}', space=sflag, size = 0x8, scoped, tag = 'scoped memory for tpu_custom_call.1']
    #allocation4 [shape = 's32[2]{0}', space=sflag, size = 0x8, scoped, tag = 'scoped memory for tpu_custom_call.1']
    #allocation5 [shape = 'u8[2048]{0}', space=vmem, size = 0x800, scoped, tag = 'output window, operand 0']
    %8 = vsyncpa [#allocation3], 0
    %s9 = scalar_lea.sflag [#allocation3], 1
    %10 = vsyncpa %s9, 0
    %11 = vsyncpa [#allocation4], 0
    %s12 = scalar_lea.sflag [#allocation4], 1
    %13 = vsyncpa %s12, 0
    loop: start=0, step=1, limit=4
    $region2: #{tpu_custom_call.1} parent=1 // loop_pre_header
      _
    $region3: #{tpu_custom_call.1} parent=1 // loop_header
      %s15 = sphi 0, %s19
      %p16 = scmp.ge.s32.totalorder %s15, 4
      %s22 = sphi 0, %s34
      %s23 = sphi 0, %s30
      %s24 = sphi 0, %s22
      %s25 = sphi 0, %s23
      %s26 = sphi 0, %s24
      %s27 = sphi 0, %s25
      %s37 = sphi 0, %s39
      %s40 = sphi 0, %s37
      %s41 = sphi 0, %s40
      %s57 = sphi 0, %s41
      %s63 = sphi 0, %s65
      %s66 = sphi 0, %s63
      %s67 = sphi 0, %s66
      %s83 = sphi 0, %s67
      %s87 = sphi 0, %s87
      %s89 = sphi 0, %s87
      %s90 = sphi 0, %s89
      %s104 = sphi 0, %s90
      %s112 = sphi 0, %s114
      %s115 = sphi 0, %s112
      %s116 = sphi 0, %s115
      %s132 = sphi 0, %s116
    $region4: #{tpu_custom_call.1} parent=1 // loop_header_branch
      %18 = sbr.rel (%p16) target = $region8
    $region5: #{tpu_custom_call.1} parent=1 // loop_body
      %s20 = ssub.s32 %s15, 1
      %s21 = ssub.s32 %s15, 2
      %s28 = sadd.s32 1, %s23
      %p29 = scmp.ge.s32.totalorder %s28, 2
      %s30 = scalar_select %p29, 0, %s28
      %s31 = sadd.s32 1, %s22
      %s32 = scalar_select %p29, %s31, %s22
      %p33 = scmp.ge.s32.totalorder %s32, 1
      %s34 = scalar_select %p33, 0, %s32
      %s35 = ssub.s32 %s23, %s30
      %p36 = scmp.eq.s32.totalorder %s35, 0
      %s38 = sadd.s32 %s37, 1
      %s39 = scalar_select %p36, %s37, %s38
      %p42 = pneg %p36
      %p43 = scmp.eq.s32.totalorder %s15, 1
      %p44 = por %p42, %p43
      %p45 = scmp.ne.s32.totalorder %s37, %s40
      %p46 = scmp.eq.s32.totalorder %s15, 0
      %p47 = por %p45, %p46
      %p48 = scmp.ne.s32.totalorder %s37, %s40
      %p49 = scmp.eq.s32.totalorder %s20, 1
      %p50 = por %p48, %p49
      %p51 = scmp.ne.s32.totalorder %s40, %s41
      %p52 = scmp.eq.s32.totalorder %s20, 0
      %p53 = por %p51, %p52
      %p54 = scmp.ne.s32.totalorder %s40, %s41
      %p55 = scmp.eq.s32.totalorder %s21, 1
      %p56 = por %p54, %p55
      %p58 = scmp.ne.s32.totalorder %s41, %s57
      %p59 = scmp.eq.s32.totalorder %s21, 0
      %p60 = por %p58, %p59
      %s61 = ssub.s32 %s22, %s34
      %p62 = scmp.eq.s32.totalorder %s61, 0
      %s64 = sadd.s32 %s63, 1
      %s65 = scalar_select %p62, %s63, %s64
      %p68 = pneg %p62
      %p69 = scmp.eq.s32.totalorder %s15, 1
      %p70 = por %p68, %p69
      %p71 = scmp.ne.s32.totalorder %s63, %s66
      %p72 = scmp.eq.s32.totalorder %s15, 0
      %p73 = por %p71, %p72
      %p74 = scmp.ne.s32.totalorder %s63, %s66
      %p75 = scmp.eq.s32.totalorder %s20, 1
      %p76 = por %p74, %p75
      %p77 = scmp.ne.s32.totalorder %s66, %s67
      %p78 = scmp.eq.s32.totalorder %s20, 0
      %p79 = por %p77, %p78
      %p80 = scmp.ne.s32.totalorder %s66, %s67
      %p81 = scmp.eq.s32.totalorder %s21, 1
      %p82 = por %p80, %p81
      %p84 = scmp.ne.s32.totalorder %s67, %s83
      %p85 = scmp.eq.s32.totalorder %s21, 0
      %p86 = por %p84, %p85
      %s88 = sadd.s32 %s87, 1
      %p91 = scmp.eq.s32.totalorder %s15, 1
      %p92 = scmp.ne.s32.totalorder %s87, %s89
      %p93 = scmp.eq.s32.totalorder %s15, 0
      %p94 = por %p92, %p93
      %p95 = scmp.ne.s32.totalorder %s87, %s89
      %p96 = scmp.eq.s32.totalorder %s20, 1
      %p97 = por %p95, %p96
      %p98 = scmp.ne.s32.totalorder %s89, %s90
      %p99 = scmp.eq.s32.totalorder %s20, 0
      %p100 = por %p98, %p99
      %p101 = scmp.ne.s32.totalorder %s89, %s90
      %p102 = scmp.eq.s32.totalorder %s21, 1
      %p103 = por %p101, %p102
      %p105 = scmp.ne.s32.totalorder %s90, %s104
      %p106 = scmp.eq.s32.totalorder %s21, 0
      %p107 = por %p105, %p106
      %s108 = ssub.s32 %s23, %s30
      %s109 = ssub.s32 %s22, %s34
      %s110 = sor.u32 %s108, %s109
      %p111 = scmp.eq.s32.totalorder %s110, 0
      %s113 = sadd.s32 %s112, 1
      %s114 = scalar_select %p111, %s112, %s113
      %p117 = pneg %p111
      %p118 = scmp.eq.s32.totalorder %s15, 1
      %p119 = por %p117, %p118
      %p120 = scmp.ne.s32.totalorder %s112, %s115
      %p121 = scmp.eq.s32.totalorder %s15, 0
      %p122 = por %p120, %p121
      %p123 = scmp.ne.s32.totalorder %s112, %s115
      %p124 = scmp.eq.s32.totalorder %s20, 1
      %p125 = por %p123, %p124
      %p126 = scmp.ne.s32.totalorder %s115, %s116
      %p127 = scmp.eq.s32.totalorder %s20, 0
      %p128 = por %p126, %p127
      %p129 = scmp.ne.s32.totalorder %s115, %s116
      %p130 = scmp.eq.s32.totalorder %s21, 1
      %p131 = por %p129, %p130
      %p133 = scmp.ne.s32.totalorder %s116, %s132
      %p134 = scmp.eq.s32.totalorder %s21, 0
      %p135 = por %p133, %p134
      %p136 = scmp.le.s32.totalorder 1, %s15
      %p137 = scmp.lt.s32.totalorder %s15, 3
      %p138 = pnand %p136, %p137
      %p139 = pneg %p138
      // Predicated region
      $region9: #{tpu_custom_call.1} parent=5 // pred_check
        _
      $region10: #{tpu_custom_call.1} parent=5 // pred_check_branch
        %141 = sbr.rel (%p138) target = $region12
      $region11: #{tpu_custom_call.1} parent=5 // pred_region
        %s142 = ssub.s32 %s15, 1
        // Predicated region
        $region13: #{tpu_custom_call.1} parent=11 // pred_check
          %p143 = pneg %p79
        $region14: #{tpu_custom_call.1} parent=11 // pred_check_branch
          %145 = sbr.rel (%p143) target = $region16
        $region15: #{tpu_custom_call.1} parent=11 // pred_region
          %p146 = scmp.lt.s32.totalorder %s24, 0
          %s147 = scalar_select %p146, %s24, 0
          %s148 = smul.addr %s147, 2
          %s149 = scalar_lea.vmem %s1, %s148
        $region16: #{tpu_custom_call.1} parent=11 // pred_fallthru
          _
        // Predicated region
        $region17: #{tpu_custom_call.1} parent=11 // pred_check
          %p150 = pneg %p100
        $region18: #{tpu_custom_call.1} parent=11 // pred_check_branch
          %152 = sbr.rel (%p150) target = $region20
        $region19: #{tpu_custom_call.1} parent=11 // pred_region
          _
        $region20: #{tpu_custom_call.1} parent=11 // pred_fallthru
          _
      $region12: #{tpu_custom_call.1} parent=5 // pred_fallthru
        _
      %p153 = scmp.lt.s32.totalorder %s15, 2
      // Predicated region
      $region21: #{tpu_custom_call.1} parent=5 // pred_check
        %p154 = pneg %p153
      $region22: #{tpu_custom_call.1} parent=5 // pred_check_branch
        %156 = sbr.rel (%p154) target = $region24
      $region23: #{tpu_custom_call.1} parent=5 // pred_region
        // Predicated region
        $region25: #{tpu_custom_call.1} parent=23 // pred_check
          %p157 = pneg %p47
        $region26: #{tpu_custom_call.1} parent=23 // pred_check_branch
          %159 = sbr.rel (%p157) target = $region28
        $region27: #{tpu_custom_call.1} parent=23 // pred_region
          %s160 = sand.u32 %s37, 1
          %s161 = scalar_lea.sflag [#allocation3], %s160
          %s162 = sand.u32 %s37, 1
          %s163 = scalar_lea.vmem [#allocation2], %s162
          %s165 = ssub.s32 16, 16
          %166 = vsyncadd %s161, %s165
          %s167 = smul.addr %s23, 16
          %s168 = scalar_lea.hbm %s0, %s167
          %s170 = sshll.u32 %s163, 4
          %s171 = int_to_ptr.vmem [resolvable:$true] %s170
          %173 = dma.hbm_to_vmem [thread:$0]  %s168, 16, %s171, %s161
        $region28: #{tpu_custom_call.1} parent=23 // pred_fallthru
          _
      $region24: #{tpu_custom_call.1} parent=5 // pred_fallthru
        _
      %p174 = scmp.le.s32.totalorder 1, %s15
      %p175 = scmp.lt.s32.totalorder %s15, 3
      %p176 = pnand %p174, %p175
      %p177 = pneg %p176
      // Predicated region
      $region29: #{tpu_custom_call.1} parent=5 // pred_check
        _
      $region30: #{tpu_custom_call.1} parent=5 // pred_check_branch
        %179 = sbr.rel (%p176) target = $region32
      $region31: #{tpu_custom_call.1} parent=5 // pred_region
        %s180 = ssub.s32 %s15, 1
        %s181 = sand.u32 %s40, 1
        %s182 = scalar_lea.sflag [#allocation3], %s181
        %s183 = sand.u32 %s40, 1
        %s184 = scalar_lea.vmem [#allocation2], %s183
        // Predicated region
        $region33: #{tpu_custom_call.1} parent=31 // pred_check
          %p185 = pneg %p53
        $region34: #{tpu_custom_call.1} parent=31 // pred_check_branch
          %187 = sbr.rel (%p185) target = $region36
        $region35: #{tpu_custom_call.1} parent=31 // pred_region
          %188 = dma.done %s182, 16
        $region36: #{tpu_custom_call.1} parent=31 // pred_fallthru
          _
        %s189 = sand.u32 %s40, 1
        %s190 = scalar_lea.sflag [#allocation3], %s189
        %s191 = sand.u32 %s40, 1
        %s192 = scalar_lea.vmem [#allocation2], %s191
        %p193 = pneg %p53
        %p194 = pneg %p50
        %p195 = scmp.lt.s32.totalorder %s24, 0
        %s196 = scalar_select %p195, %s24, 0
        %s197 = smul.addr %s196, 2
        %s198 = scalar_lea.vmem %s1, %s197
        %p199 = pneg %p79
        %p200 = pneg %p76
        %p201 = pneg %p100
        %p202 = pneg %p97
        %p203 = pneg %p128
        %p204 = pneg %p125
        %s205 = sand.u32 %s115, 1
        %s206 = scalar_lea.sflag [#allocation4], %s205
        %s207 = sand.u32 %s115, 1
        %s208 = smul.addr %s207, 2
        %s209 = scalar_lea.vmem [#allocation5], %s208
        %p210 = scmp.lt.s32.totalorder %s24, 0
        %s211 = scalar_select %p210, %s24, 0
        %s212 = smul.addr %s211, 2
        %s213 = scalar_lea.vmem %s1, %s212
        %v214 = vld [vmem:[%s213] sm:$0x3]
        %v215 = vld [vmem:[%s2] sm:$0x1]
        %v217 = vlaneseq
        %v218 = vshrl.u32 %v217, 7
        %v219 = vsub.s32 0, %v218
        %v220 = vrot.slane %v215, %v219
        %v222 = vmul.f32 %v214, %v220
        %v223 = vld [vmem:[%s184] sm:$0x1]
        %v225 = vlaneseq
        %v226 = vshrl.u32 %v225, 7
        %v227 = vsub.s32 0, %v226
        %v228 = vrot.slane %v223, %v227
        %v230 = vsub.f32 %v228, %v222
        %v231 = vmul.f32 %v230, %v230
        %232 = vst [vmem:[%s209] sm:$0x3] %v231
        %s233 = sand.u32 %s115, 1
        %s234 = scalar_lea.sflag [#allocation4], %s233
        %s235 = sand.u32 %s115, 1
        %s236 = smul.addr %s235, 2
        %s237 = scalar_lea.vmem [#allocation5], %s236
        // Predicated region
        $region37: #{tpu_custom_call.1} parent=31 // pred_check
          %p238 = pneg %p125
        $region38: #{tpu_custom_call.1} parent=31 // pred_check_branch
          %240 = sbr.rel (%p238) target = $region40
        $region39: #{tpu_custom_call.1} parent=31 // pred_region
          %s242 = ssub.s32 32, 32
          %243 = vsyncadd %s234, %s242
          %s244 = sadd.s32 %s24, %s25
          %s245 = smul.addr %s244, 32
          %s246 = scalar_lea.hbm %s3, %s245
          %s248 = sshll.u32 %s237, 4
          %s249 = int_to_ptr.vmem [resolvable:$true] %s248
          %251 = dma.vmem_to_hbm [thread:$0]  %s249, 32, %s246, %s234
        $region40: #{tpu_custom_call.1} parent=31 // pred_fallthru
          _
      $region32: #{tpu_custom_call.1} parent=5 // pred_fallthru
        _
      %p252 = scmp.le.s32.totalorder 2, %s15
      // Predicated region
      $region41: #{tpu_custom_call.1} parent=5 // pred_check
        %p253 = pneg %p252
      $region42: #{tpu_custom_call.1} parent=5 // pred_check_branch
        %255 = sbr.rel (%p253) target = $region44
      $region43: #{tpu_custom_call.1} parent=5 // pred_region
        %s256 = ssub.s32 %s15, 2
        // Predicated region
        $region45: #{tpu_custom_call.1} parent=43 // pred_check
          %p257 = pneg %p131
        $region46: #{tpu_custom_call.1} parent=43 // pred_check_branch
          %259 = sbr.rel (%p257) target = $region48
        $region47: #{tpu_custom_call.1} parent=43 // pred_region
          %s260 = sand.u32 %s116, 1
          %s261 = scalar_lea.sflag [#allocation4], %s260
          %s262 = sand.u32 %s116, 1
          %s263 = smul.addr %s262, 2
          %s264 = scalar_lea.vmem [#allocation5], %s263
          %265 = dma.done %s261, 32
        $region48: #{tpu_custom_call.1} parent=43 // pred_fallthru
          _
      $region44: #{tpu_custom_call.1} parent=5 // pred_fallthru
        _
    $region6: #{tpu_custom_call.1} parent=1 // loop_footer
      %s19 = sadd.s32 1, %s15
    $region7: #{tpu_custom_call.1} parent=1 // loop_footer_branch
      %14 = sbr.rel target = $region3
    $region8: #{tpu_custom_call.1} parent=1 // loop_exit
      _
    %266 = vsyncpa [#allocation3], 1
    %s267 = scalar_lea.sflag [#allocation3], 1
    %268 = vsyncpa %s267, 1
    %269 = vsyncpa [#allocation4], 1
    %s270 = scalar_lea.sflag [#allocation4], 1
    %271 = vsyncpa %s270, 1

</llo_original>
